<compile_context>
chip_gen: v7x
topology: tpu7x:2x2x1
jax: 0.10.0
libtpu: 0.0.40
codegen_flags: <defaults>
</compile_context>

<pallas_src>
import functools

import jax
import jax.numpy as jnp
from jax.experimental import pallas as pl
from jax.experimental.pallas import tpu as pltpu


_MIN_ROWS_FOR_PALLAS = 1024  # below this, a fused XLA dot beats kernel launch cost


def _pick_pack(n_nodes, hidden, feat, lanes=128):
    """Pack `p` consecutive nodes per row so p*hidden and p*feat are 128-lane dense."""
    if hidden % lanes == 0 and feat % lanes == 0:
        return 1
    for p in (2, 4, 8, 16):
        if n_nodes % p == 0 and (p * hidden) % lanes == 0 and (p * feat) % lanes == 0:
            return p
    return 1


def _pick_tile(n, candidates=(512, 256, 128, 64, 32, 16, 8)):
    """Largest row-tile that divides n (multiple of 8), else the full extent."""
    for c in candidates:
        if n % c == 0:
            return c
    return n  # block dim == full array dim is always legal


def _forecast_fc_kernel(x_ref, w_ref, b_ref, o_ref):
    """One (batch, node-tile) grid step of `x @ W + b`.

    x_ref: (1, 1, TN, K)  last-timestep hidden states (K = pack*hidden)
    w_ref: (K, Fp)        (block-diagonal) weight, resident across grid steps
    b_ref: (1, Fp)        bias (float32), resident
    o_ref: (1, TN, Fp)    output tile (lane-dense when Fp is a multiple of 128)
    """
    x = x_ref[0, 0]                                               # (TN, K)
    acc = jnp.dot(x, w_ref[...], preferred_element_type=jnp.float32)
    o_ref[0] = (acc + b_ref[...]).astype(o_ref.dtype)


def _forecast_fc_pallas(hidden_states_dif, w, b, *, tile_rows=None):
    """forecast_fc(hidden_states_dif[:, -1:, :, :]) via a tiled Pallas kernel."""
    B, L, N, H = hidden_states_dif.shape
    F = w.shape[1]
    x_dtype = hidden_states_dif.dtype

    p = _pick_pack(N, H, F)
    K, Fp, Np = p * H, p * F, N // p

    # Metadata-only view: (B, L, N, H) -> (B, L, N//p, p*H) (contiguous merge).
    x_p = hidden_states_dif.reshape(B, L, Np, K)
    if p > 1:
        w_p = jnp.kron(jnp.eye(p, dtype=w.dtype), w)              # block-diag (K, Fp)
        b_p = jnp.tile(b, p)                                       # (Fp,)
    else:
        w_p, b_p = w, b
    w_p = w_p.astype(x_dtype)                 # stream weights at activation precision
    b_p = b_p.astype(jnp.float32).reshape(1, Fp)

    tn = tile_rows if tile_rows is not None else _pick_tile(Np)
    grid = (B, Np // tn)
    last_t = L - 1

    # VMEM footprint (double-buffered x + out, resident w/b) is < ~2 MiB for
    # tn<=512, K=Fp=128 -- comfortably inside v7x's 32 MiB scoped default, so
    # no vmem_limit_bytes override is needed at these hidden sizes.
    out_p = pl.pallas_call(
        _forecast_fc_kernel,
        out_shape=jax.ShapeDtypeStruct((B, Np, Fp), x_dtype),
        grid=grid,
        in_specs=[
            # Only the last timestep is ever DMA'd from HBM (seq block idx L-1).
            pl.BlockSpec((1, 1, tn, K), lambda bi, ni: (bi, last_t, ni, 0)),
            pl.BlockSpec((K, Fp), lambda bi, ni: (0, 0)),          # resident weight
            pl.BlockSpec((1, Fp), lambda bi, ni: (0, 0)),          # resident bias
        ],
        out_specs=pl.BlockSpec((1, tn, Fp), lambda bi, ni: (bi, ni, 0)),
        compiler_params=pltpu.CompilerParams(
            # No reduction carried across grid steps -> both axes parallel
            # (pipelined, and shardable across v7x's two TensorCores).
            dimension_semantics=("parallel", "parallel"),
        ),
    )(x_p, w_p, b_p)

    # (B, N//p, p*F) row-major == (B, N, F) row-major -> metadata-only reshape.
    return out_p.reshape(B, 1, N, F)


def forecast_forward(gated_history_data, hidden_states_dif, w, b, *,
                     k_t, gap, output_seq_len=12,
                     use_pallas=None, tile_rows=None):
    """Faithful reproduction of Forecast.forward.

    gated_history_data: (B, L, N, H) -- only read by the reference module's
        dead loop (it builds a local tensor `_1` that is never appended to
        `predict`), so it does not influence the returned value.
    hidden_states_dif:  (B, L, N, H)
    w: (H, F)  (torch Linear weight transposed), b: (F,)
    returns: (B, 1, N, F) == forecast_fc(hidden_states_dif[:, -1:, :, :])
    """
    # The reference loop over range(output_seq_len // gap - 1) is dead code
    # w.r.t. the output; intentionally omitted from the compute path.
    del gated_history_data, k_t, gap, output_seq_len

    B, L, N, H = hidden_states_dif.shape

    if use_pallas is None:
        # Tiny matmuls are pure launch/DMA overhead in a custom kernel;
        # let XLA fuse them instead.
        use_pallas = (B * N) >= _MIN_ROWS_FOR_PALLAS

    if not use_pallas:
        x = hidden_states_dif[:, -1:, :, :]
        out = jnp.dot(x, w.astype(x.dtype), preferred_element_type=jnp.float32)
        return (out + b.astype(jnp.float32)).astype(x.dtype)

    return _forecast_fc_pallas(hidden_states_dif, w, b, tile_rows=tile_rows)


if __name__ == "__main__":
    # Shapes consistent with the module: (batch, seq, num_nodes, hidden).
    B, L, N, H = 2, 8, 512, 32
    F = 32                                   # forecast_hidden_dim
    model_args = dict(k_t=3, gap=2)

    key = jax.random.PRNGKey(0)
    k1, k2, k3, k4 = jax.random.split(key, 4)
    gated_history_data = jax.random.normal(k1, (B, L, N, H), dtype=jnp.float32)
    hidden_states_dif = jax.random.normal(k2, (B, L, N, H), dtype=jnp.float32)
    # torch nn.Linear(H, F) stores weight as (F, H); keep it as (H, F) for x @ W.
    w = (jax.random.uniform(k3, (H, F), dtype=jnp.float32) - 0.5) * (2.0 / jnp.sqrt(H))
    b = (jax.random.uniform(k4, (F,), dtype=jnp.float32) - 0.5) * (2.0 / jnp.sqrt(H))

    fwd = jax.jit(functools.partial(
        forecast_forward, k_t=model_args["k_t"], gap=model_args["gap"],
        use_pallas=True))

    # --- f32 path through the Pallas kernel ---
    out = jax.block_until_ready(fwd(gated_history_data, hidden_states_dif, w, b))
    ref = hidden_states_dif[:, -1:, :, :] @ w + b
    assert out.shape == (B, 1, N, F), out.shape
    assert jnp.allclose(out, ref, atol=1e-4, rtol=1e-4), \
        float(jnp.max(jnp.abs(out - ref)))

    # --- bf16 activations/weights (f32 accumulation inside the kernel) ---
    hsd_bf = hidden_states_dif.astype(jnp.bfloat16)
    out_bf = jax.block_until_ready(fwd(gated_history_data, hsd_bf, w, b))
    ref_bf = (hsd_bf[:, -1:, :, :].astype(jnp.float32)
              @ w.astype(jnp.bfloat16).astype(jnp.float32) + b)
    assert out_bf.dtype == jnp.bfloat16
    assert jnp.allclose(out_bf.astype(jnp.float32), ref_bf, atol=2e-2, rtol=2e-2)

    # --- tiny-shape path: falls back to a fused XLA dot (same semantics) ---
    hsd_s = hidden_states_dif[:, :, :16, :]
    ghd_s = gated_history_data[:, :, :16, :]
    out_s = forecast_forward(ghd_s, hsd_s, w, b, **model_args)
    assert jnp.allclose(out_s, hsd_s[:, -1:, :, :] @ w + b, atol=1e-4, rtol=1e-4)

    print("KERNEL_OK")
</pallas_src>

<mosaic_0001>
module attributes {stable_mosaic.version = 11 : i64} {
  func.func @_forecast_fc_kernel(%arg0: i32, %arg1: i32, %arg2: memref<1x1x128x128xf32, #tpu.memory_space<vmem>>, %arg3: memref<128x128xf32, #tpu.memory_space<vmem>>, %arg4: memref<1x128xf32, #tpu.memory_space<vmem>>, %arg5: memref<1x128x128xf32, #tpu.memory_space<vmem>>) attributes {dimension_semantics = [#tpu.dimension_semantics<parallel>, #tpu.dimension_semantics<parallel>], iteration_bounds = array<i64: 2, 1>, scalar_prefetch = 0 : i64, scratch_operands = 0 : i64, tpu.core_type = #tpu.core_type<tc>, window_params = [{transform_indices = @transform_0, window_bounds = array<i64: 1, 1, 128, 128>}, {pipeline_mode = #tpu.pipeline_mode<synchronous>, transform_indices = @transform_1, window_bounds = array<i64: 128, 128>}, {pipeline_mode = #tpu.pipeline_mode<synchronous>, transform_indices = @transform_2, window_bounds = array<i64: 1, 128>}, {transform_indices = @transform_3, window_bounds = array<i64: 1, 128, 128>}]} {
    %c0 = arith.constant 0 : index
    %c0_0 = arith.constant 0 : index
    %c0_1 = arith.constant 0 : index
    %c0_2 = arith.constant 0 : index
    %0 = vector.load %arg2[%c0, %c0_0, %c0_1, %c0_2] : memref<1x1x128x128xf32, #tpu.memory_space<vmem>>, vector<1x1x128x128xf32>
    %1 = vector.shape_cast %0 : vector<1x1x128x128xf32> to vector<128x128xf32>
    %c0_3 = arith.constant 0 : index
    %c0_4 = arith.constant 0 : index
    %2 = vector.load %arg3[%c0_3, %c0_4] : memref<128x128xf32, #tpu.memory_space<vmem>>, vector<128x128xf32>
    %cst = arith.constant dense<0.000000e+00> : vector<128x128xf32>
    %3 = tpu.matmul %1, %2, %cst {dimension_numbers = #tpu.dot_dimension_numbers<[1], [0], [0], [1], [0, 0, 1, 1], [], []>} : vector<128x128xf32>, vector<128x128xf32>, vector<128x128xf32> -> vector<128x128xf32>
    %c0_5 = arith.constant 0 : index
    %c0_6 = arith.constant 0 : index
    %4 = vector.load %arg4[%c0_5, %c0_6] : memref<1x128xf32, #tpu.memory_space<vmem>>, vector<1x128xf32>
    %5 = vector.broadcast %4 : vector<1x128xf32> to vector<128x128xf32>
    %6 = arith.addf %3, %5 : vector<128x128xf32>
    %c0_7 = arith.constant 0 : index
    %c0_8 = arith.constant 0 : index
    %c0_9 = arith.constant 0 : index
    %7 = vector.load %arg5[%c0_7, %c0_8, %c0_9] : memref<1x128x128xf32, #tpu.memory_space<vmem>>, vector<1x128x128xf32>
    %8 = vector.shape_cast %7 : vector<1x128x128xf32> to vector<128x128xf32>
    %9 = vector.shape_cast %6 : vector<128x128xf32> to vector<1x128x128xf32>
    tpu.vector_store %arg5[%c0_7, %c0_8, %c0_9], %9 {strides = array<i32>} : memref<1x128x128xf32, #tpu.memory_space<vmem>>, vector<1x128x128xf32>,
    return
  }
  func.func @transform_0(%arg0: i32, %arg1: i32) -> (i32, i32, i32, i32) {
    %c7_i32 = arith.constant 7 : i32
    %c0_i32 = arith.constant 0 : i32
    %c0_i32_0 = arith.constant 0 : i32
    return %arg0, %c7_i32, %arg1, %c0_i32 : i32, i32, i32, i32
  }
  func.func @transform_1(%arg0: i32, %arg1: i32) -> (i32, i32) {
    %c0_i32 = arith.constant 0 : i32
    %c0_i32_0 = arith.constant 0 : i32
    %c0_i32_1 = arith.constant 0 : i32
    return %c0_i32, %c0_i32_0 : i32, i32
  }
  func.func @transform_2(%arg0: i32, %arg1: i32) -> (i32, i32) {
    %c0_i32 = arith.constant 0 : i32
    %c0_i32_0 = arith.constant 0 : i32
    %c0_i32_1 = arith.constant 0 : i32
    return %c0_i32, %c0_i32_0 : i32, i32
  }
  func.func @transform_3(%arg0: i32, %arg1: i32) -> (i32, i32, i32) {
    %c0_i32 = arith.constant 0 : i32
    %c0_i32_0 = arith.constant 0 : i32
    return %arg0, %arg1, %c0_i32 : i32, i32, i32
  }
}

</mosaic_0001>

<llo_original>
// kernel: tile.8
$region0: #{tile.8}
  #allocation0 [shape = 's32[1]{0}', space=sflag, size = 0x4, scoped, tag = 'scoped memory for tile.8']
  %s0 = inlined_call_operand.vmem [shape: f32[32], index: 0, kind: input, shape index: {}]
  %s1 = inlined_call_operand.vmem [shape: f32[4,32], index: 1, kind: output, shape index: {}]
  // Predicated region
  $region2: #{tile.8} parent=0 // pred_check
    _
  $region3: #{tile.8} parent=0 // pred_check_branch
    %3 = sbr.rel (0) target = $region5
  $region4: #{tile.8} parent=0 // pred_region
    _
  $region5: #{tile.8} parent=0 // pred_fallthru
    _
  %v4 = vld [vmem:[%s0] ss:$0 sm:$0xff]
  %5 = vst [vmem:[%s1] sm:$0xf] %v4

// kernel: tile.9
$region0: #{tile.9}
  %s0 = inlined_call_operand.vmem [shape: f32[4,32], index: 0, kind: input, shape index: {}]
  %s1 = inlined_call_operand.vmem [shape: f32[1,128], index: 1, kind: output, shape index: {}]
  $region1: #{tile.9} parent=0
    #allocation0 [shape = 'u8[4096]{0}', space=vmem, size = 0x1000, scoped, tag = 'scoped mem for output reshape']
    #allocation1 [shape = 'u8[4096]{0}', space=vmem, size = 0x1000, scoped, tag = 'scoped mem for input reshape']
    %s3 = sshllo.u32 0, 4
    %v4 = vld [vmem:[%s0] sm:%s3]
    %5 = vst [vmem:[#allocation1] sm:%s3] %v4
    %v6 = vld [vmem:[#allocation1] sm:$0x1]
    %vm7 = vcmask 261120
    %8 = vst.msk [vmem:[#allocation0] sm:$0x1] %vm7, %v6
    %s9 = scalar_lea.vmem [#allocation1], 3
    %v10 = vld [vmem:[%s9] sm:$0x1]
    %11 = vrot.lane.b32.xlu0 %v10, 96
    %v12 = vpop.permute.xlu0 %11
    %vm13 = vcmask 1048320
    %14 = vst.msk [vmem:[#allocation0] sm:$0x1] %vm13, %v12
    %s15 = scalar_lea.vmem [#allocation1], 2
    %v16 = vld [vmem:[%s15] sm:$0x1]
    %17 = vrot.lane.b32.xlu0 %v16, 64
    %v18 = vpop.permute.xlu0 %17
    %vm19 = vcmask 785920
    %20 = vst.msk [vmem:[#allocation0] sm:$0x1] %vm19, %v18
    %s21 = scalar_lea.vmem [#allocation1], 1
    %v22 = vld [vmem:[%s21] sm:$0x1]
    %23 = vrot.lane.b32.xlu0 %v22, 32
    %v24 = vpop.permute.xlu0 %23
    %vm25 = vcmask 523520
    %26 = vst.msk [vmem:[#allocation0] sm:$0x1] %vm25, %v24
    %s28 = sshllo.u32 0, 1
    %v30 = vld [vmem:[#allocation0] sm:%s28]
    %s31 = sshllo.u32 0, 1
    %32 = vst [vmem:[%s1] sm:%s31] %v30

// kernel: forecast_forward.1
$region0: #{forecast_forward.1}
  #allocation0 [shape = 'u32[]', space=smem, size = 0x4, offset = 0x4, fixed_abs, tag = 'smem constant byte address 0x4 - core index']
  #allocation1 [shape = 'u32[144,128]{1,0:T(1,128)}', space=vmem, size = 0x12000, scoped, tag = 'internal scratch']
  %s0 = inlined_call_operand.vmem [shape: f32[2,8,128,128], index: 0, kind: input, shape index: {}]
  %s1 = inlined_call_operand.vmem [shape: f32[128,128], index: 1, kind: input, shape index: {}]
  %s2 = inlined_call_operand.vmem [shape: f32[1,128], index: 2, kind: input, shape index: {}]
  %s3 = inlined_call_operand.vmem [shape: f32[2,128,128], index: 3, kind: output, shape index: {}]
  %s4 = sld [smem:[#allocation0]]
  $region45: #{forecast_forward.1} parent=0
    _
  %s6 = ssub.s32 1, %s4
  %s7 = scalar_select 0, %s6, %s4
  loop: start=0, step=1, limit=4
  $region2: #{forecast_forward.1} parent=0 // loop_pre_header
    _
  $region3: #{forecast_forward.1} parent=0 // loop_header
    %s9 = sphi 0, %s13
    %p10 = scmp.ge.s32.totalorder %s9, 4
    %s16 = sphi 0, %s28
    %s17 = sphi 0, %s24
    %s18 = sphi 0, %s16
    %s19 = sphi 0, %s17
    %s20 = sphi 0, %s18
    %s21 = sphi 0, %s19
    %s33 = sphi 0, %s35
    %s36 = sphi 0, %s33
    %s37 = sphi 0, %s36
    %s53 = sphi 0, %s37
    %s57 = sphi 0, %s57
    %s59 = sphi 0, %s57
    %s60 = sphi 0, %s59
    %s74 = sphi 0, %s60
    %s78 = sphi 0, %s78
    %s80 = sphi 0, %s78
    %s81 = sphi 0, %s80
    %s95 = sphi 0, %s81
    %s103 = sphi 0, %s105
    %s106 = sphi 0, %s103
    %s107 = sphi 0, %s106
    %s123 = sphi 0, %s107
  $region4: #{forecast_forward.1} parent=0 // loop_header_branch
    %12 = sbr.rel (%p10) target = $region8
  $region5: #{forecast_forward.1} parent=0 // loop_body
    %s14 = ssub.s32 %s9, 1
    %s15 = ssub.s32 %s9, 2
    %s22 = sadd.s32 1, %s17
    %p23 = scmp.ge.s32.totalorder %s22, 1
    %s24 = scalar_select %p23, 0, %s22
    %s25 = sadd.s32 1, %s16
    %s26 = scalar_select %p23, %s25, %s16
    %p27 = scmp.ge.s32.totalorder %s26, 2
    %s28 = scalar_select %p27, 0, %s26
    %s29 = ssub.s32 %s16, %s28
    %s30 = ssub.s32 %s17, %s24
    %s31 = sor.u32 %s29, %s30
    %p32 = scmp.eq.s32.totalorder %s31, 0
    %s34 = sadd.s32 %s33, 1
    %s35 = scalar_select %p32, %s33, %s34
    %p38 = pneg %p32
    %p39 = scmp.eq.s32.totalorder %s9, 1
    %p40 = por %p38, %p39
    %p41 = scmp.ne.s32.totalorder %s33, %s36
    %p42 = scmp.eq.s32.totalorder %s9, 0
    %p43 = por %p41, %p42
    %p44 = scmp.ne.s32.totalorder %s33, %s36
    %p45 = scmp.eq.s32.totalorder %s14, 1
    %p46 = por %p44, %p45
    %p47 = scmp.ne.s32.totalorder %s36, %s37
    %p48 = scmp.eq.s32.totalorder %s14, 0
    %p49 = por %p47, %p48
    %p50 = scmp.ne.s32.totalorder %s36, %s37
    %p51 = scmp.eq.s32.totalorder %s15, 1
    %p52 = por %p50, %p51
    %p54 = scmp.ne.s32.totalorder %s37, %s53
    %p55 = scmp.eq.s32.totalorder %s15, 0
    %p56 = por %p54, %p55
    %s58 = sadd.s32 %s57, 1
    %p61 = scmp.eq.s32.totalorder %s9, 1
    %p62 = scmp.ne.s32.totalorder %s57, %s59
    %p63 = scmp.eq.s32.totalorder %s9, 0
    %p64 = por %p62, %p63
    %p65 = scmp.ne.s32.totalorder %s57, %s59
    %p66 = scmp.eq.s32.totalorder %s14, 1
    %p67 = por %p65, %p66
    %p68 = scmp.ne.s32.totalorder %s59, %s60
    %p69 = scmp.eq.s32.totalorder %s14, 0
    %p70 = por %p68, %p69
    %p71 = scmp.ne.s32.totalorder %s59, %s60
    %p72 = scmp.eq.s32.totalorder %s15, 1
    %p73 = por %p71, %p72
    %p75 = scmp.ne.s32.totalorder %s60, %s74
    %p76 = scmp.eq.s32.totalorder %s15, 0
    %p77 = por %p75, %p76
    %s79 = sadd.s32 %s78, 1
    %p82 = scmp.eq.s32.totalorder %s9, 1
    %p83 = scmp.ne.s32.totalorder %s78, %s80
    %p84 = scmp.eq.s32.totalorder %s9, 0
    %p85 = por %p83, %p84
    %p86 = scmp.ne.s32.totalorder %s78, %s80
    %p87 = scmp.eq.s32.totalorder %s14, 1
    %p88 = por %p86, %p87
    %p89 = scmp.ne.s32.totalorder %s80, %s81
    %p90 = scmp.eq.s32.totalorder %s14, 0
    %p91 = por %p89, %p90
    %p92 = scmp.ne.s32.totalorder %s80, %s81
    %p93 = scmp.eq.s32.totalorder %s15, 1
    %p94 = por %p92, %p93
    %p96 = scmp.ne.s32.totalorder %s81, %s95
    %p97 = scmp.eq.s32.totalorder %s15, 0
    %p98 = por %p96, %p97
    %s99 = ssub.s32 %s16, %s28
    %s100 = ssub.s32 %s17, %s24
    %s101 = sor.u32 %s99, %s100
    %p102 = scmp.eq.s32.totalorder %s101, 0
    %s104 = sadd.s32 %s103, 1
    %s105 = scalar_select %p102, %s103, %s104
    %p108 = pneg %p102
    %p109 = scmp.eq.s32.totalorder %s9, 1
    %p110 = por %p108, %p109
    %p111 = scmp.ne.s32.totalorder %s103, %s106
    %p112 = scmp.eq.s32.totalorder %s9, 0
    %p113 = por %p111, %p112
    %p114 = scmp.ne.s32.totalorder %s103, %s106
    %p115 = scmp.eq.s32.totalorder %s14, 1
    %p116 = por %p114, %p115
    %p117 = scmp.ne.s32.totalorder %s106, %s107
    %p118 = scmp.eq.s32.totalorder %s14, 0
    %p119 = por %p117, %p118
    %p120 = scmp.ne.s32.totalorder %s106, %s107
    %p121 = scmp.eq.s32.totalorder %s15, 1
    %p122 = por %p120, %p121
    %p124 = scmp.ne.s32.totalorder %s107, %s123
    %p125 = scmp.eq.s32.totalorder %s15, 0
    %p126 = por %p124, %p125
    %p127 = scmp.le.s32.totalorder 1, %s9
    %p128 = scmp.lt.s32.totalorder %s9, 3
    %p129 = pnand %p127, %p128
    %p130 = pneg %p129
    // Predicated region
    $region9: #{forecast_forward.1} parent=5 // pred_check
      _
    $region10: #{forecast_forward.1} parent=5 // pred_check_branch
      %132 = sbr.rel (%p129) target = $region12
    $region11: #{forecast_forward.1} parent=5 // pred_region
      %s133 = ssub.s32 %s9, 1
      // Predicated region
      $region13: #{forecast_forward.1} parent=11 // pred_check
        %p134 = pneg %p70
      $region14: #{forecast_forward.1} parent=11 // pred_check_branch
        %136 = sbr.rel (%p134) target = $region16
      $region15: #{forecast_forward.1} parent=11 // pred_region
        _
      $region16: #{forecast_forward.1} parent=11 // pred_fallthru
        _
      // Predicated region
      $region17: #{forecast_forward.1} parent=11 // pred_check
        %p137 = pneg %p91
      $region18: #{forecast_forward.1} parent=11 // pred_check_branch
        %139 = sbr.rel (%p137) target = $region20
      $region19: #{forecast_forward.1} parent=11 // pred_region
        _
      $region20: #{forecast_forward.1} parent=11 // pred_fallthru
        _
    $region12: #{forecast_forward.1} parent=5 // pred_fallthru
      _
    %p140 = scmp.lt.s32.totalorder %s9, 2
    // Predicated region
    $region21: #{forecast_forward.1} parent=5 // pred_check
      %p141 = pneg %p140
    $region22: #{forecast_forward.1} parent=5 // pred_check_branch
      %143 = sbr.rel (%p141) target = $region24
    $region23: #{forecast_forward.1} parent=5 // pred_region
      // Predicated region
      $region25: #{forecast_forward.1} parent=23 // pred_check
        %p144 = pneg %p43
      $region26: #{forecast_forward.1} parent=23 // pred_check_branch
        %146 = sbr.rel (%p144) target = $region28
      $region27: #{forecast_forward.1} parent=23 // pred_region
        %s147 = smul.u32 16, %s17
        %p148 = scmp.lt.s32.totalorder %s16, 1
        %s149 = scalar_select %p148, %s16, 1
        %p150 = scmp.lt.s32.totalorder %s147, 15
        %s151 = scalar_select %p150, %s147, 15
        %s152 = sadd.s32 %s151, 112
        %s153 = smul.addr %s149, 128
        %s154 = sadd.s32 %s152, %s153
        %s155 = smul.addr %s154, 8
        %s156 = scalar_lea.vmem %s0, %s155
        %s157 = smul.u32 16, %s17
      $region28: #{forecast_forward.1} parent=23 // pred_fallthru
        _
    $region24: #{forecast_forward.1} parent=5 // pred_fallthru
      _
    %p158 = scmp.le.s32.totalorder 1, %s9
    %p159 = scmp.lt.s32.totalorder %s9, 3
    %p160 = pnand %p158, %p159
    %p161 = pneg %p160
    // Predicated region
    $region29: #{forecast_forward.1} parent=5 // pred_check
      _
    $region30: #{forecast_forward.1} parent=5 // pred_check_branch
      %163 = sbr.rel (%p160) target = $region32
    $region31: #{forecast_forward.1} parent=5 // pred_region
      %s164 = ssub.s32 %s9, 1
      %s165 = smul.u32 16, %s19
      %p166 = scmp.lt.s32.totalorder %s18, 1
      %s167 = scalar_select %p166, %s18, 1
      %p168 = scmp.lt.s32.totalorder %s165, 15
      %s169 = scalar_select %p168, %s165, 15
      %s170 = sadd.s32 %s169, 112
      %s171 = smul.addr %s167, 128
      %s172 = sadd.s32 %s170, %s171
      %s173 = smul.addr %s172, 8
      %s174 = scalar_lea.vmem %s0, %s173
      %p175 = pneg %p49
      %p176 = pneg %p46
      %p177 = pneg %p70
      %p178 = pneg %p67
      %p179 = pneg %p91
      %p180 = pneg %p88
      %p181 = pneg %p119
      %p182 = pneg %p116
      %s183 = smul.u32 16, %s19
      %p184 = scmp.lt.s32.totalorder %s18, 1
      %s185 = scalar_select %p184, %s18, 1
      %p186 = scmp.lt.s32.totalorder %s183, 15
      %s187 = scalar_select %p186, %s183, 15
      %s188 = smul.addr %s185, 16
      %s189 = sadd.s32 %s187, %s188
      %s190 = smul.addr %s189, 8
      %s191 = scalar_lea.vmem %s3, %s190
      %s192 = smul.u32 16, %s19
      %p193 = scmp.lt.s32.totalorder %s18, 1
      %s194 = scalar_select %p193, %s18, 1
      %p195 = scmp.lt.s32.totalorder %s192, 15
      %s196 = scalar_select %p195, %s192, 15
      %s197 = sadd.s32 %s196, 112
      %s198 = smul.addr %s194, 128
      %s199 = sadd.s32 %s197, %s198
      %s200 = smul.addr %s199, 8
      %s201 = scalar_lea.vmem %s0, %s200
      %s202 = smul.u32 16, %s19
      %s203 = smul.u32 16, %s19
      %p204 = scmp.lt.s32.totalorder %s18, 1
      %s205 = scalar_select %p204, %s18, 1
      %p206 = scmp.lt.s32.totalorder %s203, 15
      %s207 = scalar_select %p206, %s203, 15
      %s208 = smul.addr %s205, 16
      %s209 = sadd.s32 %s207, %s208
      %s210 = smul.addr %s209, 8
      %s211 = scalar_lea.vmem %s3, %s210
      %s212 = smul.u32 16, %s19
      %v213 = vld [vmem:[%s201] sm:$0xff]
      %v214 = vld [vmem:[%s201 + $0x8] sm:$0xff]
      %v215 = vld [vmem:[%s201 + $0x10] sm:$0xff]
      %v216 = vld [vmem:[%s201 + $0x18] sm:$0xff]
      %v217 = vld [vmem:[%s201 + $0x20] sm:$0xff]
      %v218 = vld [vmem:[%s201 + $0x28] sm:$0xff]
      %v219 = vld [vmem:[%s201 + $0x30] sm:$0xff]
      %v220 = vld [vmem:[%s201 + $0x38] sm:$0xff]
      %v221 = vld [vmem:[%s201 + $0x40] sm:$0xff]
      %v222 = vld [vmem:[%s201 + $0x48] sm:$0xff]
      %v223 = vld [vmem:[%s201 + $0x50] sm:$0xff]
      %v224 = vld [vmem:[%s201 + $0x58] sm:$0xff]
      %v225 = vld [vmem:[%s201 + $0x60] sm:$0xff]
      %v226 = vld [vmem:[%s201 + $0x68] sm:$0xff]
      %v227 = vld [vmem:[%s201 + $0x70] sm:$0xff]
      %v228 = vld [vmem:[%s201 + $0x78] sm:$0xff]
      %v229 = vld [vmem:[%s1] sm:$0xff]
      %v230 = vld [vmem:[%s1 + $0x8] sm:$0xff]
      %v231 = vld [vmem:[%s1 + $0x10] sm:$0xff]
      %v232 = vld [vmem:[%s1 + $0x18] sm:$0xff]
      %v233 = vld [vmem:[%s1 + $0x20] sm:$0xff]
      %v234 = vld [vmem:[%s1 + $0x28] sm:$0xff]
      %v235 = vld [vmem:[%s1 + $0x30] sm:$0xff]
      %v236 = vld [vmem:[%s1 + $0x38] sm:$0xff]
      %v237 = vld [vmem:[%s1 + $0x40] sm:$0xff]
      %v238 = vld [vmem:[%s1 + $0x48] sm:$0xff]
      %v239 = vld [vmem:[%s1 + $0x50] sm:$0xff]
      %v240 = vld [vmem:[%s1 + $0x58] sm:$0xff]
      %v241 = vld [vmem:[%s1 + $0x60] sm:$0xff]
      %v242 = vld [vmem:[%s1 + $0x68] sm:$0xff]
      %v243 = vld [vmem:[%s1 + $0x70] sm:$0xff]
      %v244 = vld [vmem:[%s1 + $0x78] sm:$0xff]
      %v245 = vld [vmem:[%s2] sm:$0x1]
      %v247 = vlaneseq
      %v248 = vshrl.u32 %v247, 7
      %v249 = vsub.s32 0, %v248
      %v250 = vrot.slane %v245, %v249
      %252 = vmatprep.subr.mxu0 0.0
      %253 = vmatpush1.msra.mxu0 %v229
      %254 = vmatprep.subr.mxu0 0.0
      %255 = vmatpush1.msra.mxu0 %v230
      %256 = vmatprep.subr.mxu0 0.0
      %257 = vmatpush1.msra.mxu0 %v231
      %258 = vmatprep.subr.mxu0 0.0
      %259 = vmatpush1.msra.mxu0 %v232
      %260 = vmatprep.subr.mxu0 0.0
      %261 = vmatpush1.msra.mxu0 %v233
      %262 = vmatprep.subr.mxu0 0.0
      %263 = vmatpush1.msra.mxu0 %v234
      %264 = vmatprep.subr.mxu0 0.0
      %265 = vmatpush1.msra.mxu0 %v235
      %266 = vmatprep.subr.mxu0 0.0
      %267 = vmatpush1.msra.mxu0 %v236
      %268 = vmatprep.subr.mxu0 0.0
      %269 = vmatpush1.msra.mxu0 %v237
      %270 = vmatprep.subr.mxu0 0.0
      %271 = vmatpush1.msra.mxu0 %v238
      %272 = vmatprep.subr.mxu0 0.0
      %273 = vmatpush1.msra.mxu0 %v239
      %274 = vmatprep.subr.mxu0 0.0
      %275 = vmatpush1.msra.mxu0 %v240
      %276 = vmatprep.subr.mxu0 0.0
      %277 = vmatpush1.msra.mxu0 %v241
      %278 = vmatprep.subr.mxu0 0.0
      %279 = vmatpush1.msra.mxu0 %v242
      %280 = vmatprep.subr.mxu0 0.0
      %281 = vmatpush1.msra.mxu0 %v243
      %282 = vmatprep.subr.mxu0 0.0
      %283 = vmatpush1.msra.mxu0 %v244
      %284 = vmatprep.subr.mxu0 0.0
      %285 = vmatpush1.msra.mxu0 0.0
      %286 = vmatprep.subr.mxu0 0.0
      %287 = vmatpush1.msra.mxu0 0.0
      %288 = vmatprep.subr.mxu0 0.0
      %289 = vmatpush1.msra.mxu0 0.0
      %290 = vmatprep.subr.mxu0 0.0
      %291 = vmatpush1.msra.mxu0 0.0
      %292 = vmatprep.subr.mxu0 0.0
      %293 = vmatpush1.msra.mxu0 0.0
      %294 = vmatprep.subr.mxu0 0.0
      %295 = vmatpush1.msra.mxu0 0.0
      %296 = vmatprep.subr.mxu0 0.0
      %297 = vmatpush1.msra.mxu0 0.0
      %298 = vmatprep.subr.mxu0 0.0
      %299 = vmatpush1.msra.mxu0 0.0
      %300 = vmatprep.subr.mxu0 0.0
      %301 = vmatpush1.msra.mxu0 0.0
      %302 = vmatprep.subr.mxu0 0.0
      %303 = vmatpush1.msra.mxu0 0.0
      %304 = vmatprep.subr.mxu0 0.0
      %305 = vmatpush1.msra.mxu0 0.0
      %306 = vmatprep.subr.mxu0 0.0
      %307 = vmatpush1.msra.mxu0 0.0
      %308 = vmatprep.subr.mxu0 0.0
      %309 = vmatpush1.msra.mxu0 0.0
      %310 = vmatprep.subr.mxu0 0.0
      %311 = vmatpush1.msra.mxu0 0.0
      %312 = vmatprep.subr.mxu0 0.0
      %313 = vmatpush1.msra.mxu0 0.0
      %314 = vmatprep.subr.mxu0 0.0
      %315 = vmatpush1.msra.mxu0 0.0
      %316 = vmatprep.mubr.f32.mxu0 0.0
      %317 = vmatmul.mubr.f32.gmra.mrb[0].mxu0 %v213
      %v318 = vpop.f32.mrb[0].mxu0
      %v319 = vadd.f32 %v250, %v318
      %v320 = vpop.f32.mrb[0].mxu0
      %321 = vmatprep.mubr.f32.mxu0 0.0
      %322 = vmatmul.mubr.f32.gmra.mrb[0].mxu0 %v214
      %v323 = vpop.f32.mrb[0].mxu0
      %v324 = vadd.f32 %v250, %v323
      %v325 = vpop.f32.mrb[0].mxu0
      %326 = vmatprep.mubr.f32.mxu0 0.0
      %327 = vmatmul.mubr.f32.gmra.mrb[0].mxu0 %v215
      %v328 = vpop.f32.mrb[0].mxu0
      %v329 = vadd.f32 %v250, %v328
      %v330 = vpop.f32.mrb[0].mxu0
      %331 = vmatprep.mubr.f32.mxu0 0.0
      %332 = vmatmul.mubr.f32.gmra.mrb[0].mxu0 %v216
      %v333 = vpop.f32.mrb[0].mxu0
      %v334 = vadd.f32 %v250, %v333
      %v335 = vpop.f32.mrb[0].mxu0
      %336 = vmatprep.mubr.f32.mxu0 0.0
      %337 = vmatmul.mubr.f32.gmra.mrb[0].mxu0 %v217
      %v338 = vpop.f32.mrb[0].mxu0
      %v339 = vadd.f32 %v250, %v338
      %v340 = vpop.f32.mrb[0].mxu0
      %341 = vmatprep.mubr.f32.mxu0 0.0
      %342 = vmatmul.mubr.f32.gmra.mrb[0].mxu0 %v218
      %v343 = vpop.f32.mrb[0].mxu0
      %v344 = vadd.f32 %v250, %v343
      %v345 = vpop.f32.mrb[0].mxu0
      %346 = vmatprep.mubr.f32.mxu0 0.0
      %347 = vmatmul.mubr.f32.gmra.mrb[0].mxu0 %v219
      %v348 = vpop.f32.mrb[0].mxu0
      %v349 = vadd.f32 %v250, %v348
      %v350 = vpop.f32.mrb[0].mxu0
      %351 = vmatprep.mubr.f32.mxu0 0.0
      %352 = vmatmul.mubr.f32.gmra.mrb[0].mxu0 %v220
      %v353 = vpop.f32.mrb[0].mxu0
      %v354 = vadd.f32 %v250, %v353
      %v355 = vpop.f32.mrb[0].mxu0
      %356 = vmatprep.mubr.f32.mxu0 0.0
      %357 = vmatmul.mubr.f32.gmra.mrb[0].mxu0 %v221
      %v358 = vpop.f32.mrb[0].mxu0
      %v359 = vadd.f32 %v250, %v358
      %v360 = vpop.f32.mrb[0].mxu0
      %361 = vmatprep.mubr.f32.mxu0 0.0
      %362 = vmatmul.mubr.f32.gmra.mrb[0].mxu0 %v222
      %v363 = vpop.f32.mrb[0].mxu0
      %v364 = vadd.f32 %v250, %v363
      %v365 = vpop.f32.mrb[0].mxu0
      %366 = vmatprep.mubr.f32.mxu0 0.0
      %367 = vmatmul.mubr.f32.gmra.mrb[0].mxu0 %v223
      %v368 = vpop.f32.mrb[0].mxu0
      %v369 = vadd.f32 %v250, %v368
      %v370 = vpop.f32.mrb[0].mxu0
      %371 = vmatprep.mubr.f32.mxu0 0.0
      %372 = vmatmul.mubr.f32.gmra.mrb[0].mxu0 %v224
      %v373 = vpop.f32.mrb[0].mxu0
      %v374 = vadd.f32 %v250, %v373
      %v375 = vpop.f32.mrb[0].mxu0
      %376 = vmatprep.mubr.f32.mxu0 0.0
      %377 = vmatmul.mubr.f32.gmra.mrb[0].mxu0 %v225
      %v378 = vpop.f32.mrb[0].mxu0
      %v379 = vadd.f32 %v250, %v378
      %v380 = vpop.f32.mrb[0].mxu0
      %381 = vmatprep.mubr.f32.mxu0 0.0
      %382 = vmatmul.mubr.f32.gmra.mrb[0].mxu0 %v226
      %v383 = vpop.f32.mrb[0].mxu0
      %v384 = vadd.f32 %v250, %v383
      %v385 = vpop.f32.mrb[0].mxu0
      %386 = vmatprep.mubr.f32.mxu0 0.0
      %387 = vmatmul.mubr.f32.gmra.mrb[0].mxu0 %v227
      %v388 = vpop.f32.mrb[0].mxu0
      %v389 = vadd.f32 %v250, %v388
      %v390 = vpop.f32.mrb[0].mxu0
      %391 = vmatprep.mubr.f32.mxu0 0.0
      %392 = vmatmul.mubr.f32.gmra.mrb[0].mxu0 %v228
      %v393 = vpop.f32.mrb[0].mxu0
      %v394 = vadd.f32 %v250, %v393
      %v395 = vpop.f32.mrb[0].mxu0
      %396 = vdwg.mxu0
      %397 = vst [vmem:[%s211] sm:$0xff] %v319
      %398 = vst [vmem:[%s211 + $0x8] sm:$0xff] %v324
      %399 = vst [vmem:[%s211 + $0x10] sm:$0xff] %v329
      %400 = vst [vmem:[%s211 + $0x18] sm:$0xff] %v334
      %401 = vst [vmem:[%s211 + $0x20] sm:$0xff] %v339
      %402 = vst [vmem:[%s211 + $0x28] sm:$0xff] %v344
      %403 = vst [vmem:[%s211 + $0x30] sm:$0xff] %v349
      %404 = vst [vmem:[%s211 + $0x38] sm:$0xff] %v354
      %405 = vst [vmem:[%s211 + $0x40] sm:$0xff] %v359
      %406 = vst [vmem:[%s211 + $0x48] sm:$0xff] %v364
      %407 = vst [vmem:[%s211 + $0x50] sm:$0xff] %v369
      %408 = vst [vmem:[%s211 + $0x58] sm:$0xff] %v374
      %409 = vst [vmem:[%s211 + $0x60] sm:$0xff] %v379
      %410 = vst [vmem:[%s211 + $0x68] sm:$0xff] %v384
      %411 = vst [vmem:[%s211 + $0x70] sm:$0xff] %v389
      %412 = vst [vmem:[%s211 + $0x78] sm:$0xff] %v394
      %s413 = smul.u32 16, %s19
      %p414 = scmp.lt.s32.totalorder %s18, 1
      %s415 = scalar_select %p414, %s18, 1
      %p416 = scmp.lt.s32.totalorder %s413, 15
      %s417 = scalar_select %p416, %s413, 15
      %s418 = smul.addr %s415, 16
      %s419 = sadd.s32 %s417, %s418
      %s420 = smul.addr %s419, 8
      %s421 = scalar_lea.vmem %s3, %s420
      // Predicated region
      $region33: #{forecast_forward.1} parent=31 // pred_check
        %p422 = pneg %p116
      $region34: #{forecast_forward.1} parent=31 // pred_check_branch
        %424 = sbr.rel (%p422) target = $region36
      $region35: #{forecast_forward.1} parent=31 // pred_region
        %s425 = smul.u32 16, %s19
      $region36: #{forecast_forward.1} parent=31 // pred_fallthru
        _
    $region32: #{forecast_forward.1} parent=5 // pred_fallthru
      _
    %p426 = scmp.le.s32.totalorder 2, %s9
    // Predicated region
    $region37: #{forecast_forward.1} parent=5 // pred_check
      %p427 = pneg %p426
    $region38: #{forecast_forward.1} parent=5 // pred_check_branch
      %429 = sbr.rel (%p427) target = $region40
    $region39: #{forecast_forward.1} parent=5 // pred_region
      %s430 = ssub.s32 %s9, 2
      // Predicated region
      $region41: #{forecast_forward.1} parent=39 // pred_check
        %p431 = pneg %p122
      $region42: #{forecast_forward.1} parent=39 // pred_check_branch
        %433 = sbr.rel (%p431) target = $region44
      $region43: #{forecast_forward.1} parent=39 // pred_region
        %s434 = smul.u32 16, %s21
        %p435 = scmp.lt.s32.totalorder %s20, 1
        %s436 = scalar_select %p435, %s20, 1
        %p437 = scmp.lt.s32.totalorder %s434, 15
        %s438 = scalar_select %p437, %s434, 15
        %s439 = smul.addr %s436, 16
        %s440 = sadd.s32 %s438, %s439
        %s441 = smul.addr %s440, 8
        %s442 = scalar_lea.vmem %s3, %s441
      $region44: #{forecast_forward.1} parent=39 // pred_fallthru
        _
    $region40: #{forecast_forward.1} parent=5 // pred_fallthru
      _
  $region6: #{forecast_forward.1} parent=0 // loop_footer
    %s13 = sadd.s32 1, %s9
  $region7: #{forecast_forward.1} parent=0 // loop_footer_branch
    %8 = sbr.rel target = $region3
  $region8: #{forecast_forward.1} parent=0 // loop_exit
    _

</llo_original>
